<compile_context>
chip_gen: v7x
topology: tpu7x:2x2x1
jax: 0.10.0
libtpu: 0.0.40
codegen_flags: <defaults>
</compile_context>

<pallas_src>
import jax
import jax.numpy as jnp
from jax.experimental import pallas as pl
from jax.experimental.pallas import tpu as pltpu

INPUT_SIZE = 128
HIDDEN = 32
NUM_LAYERS = 2
DROPOUT = 0.2

_TB_CAP = 4096      # batch-tile cap (rows): 2 MiB of f32 x per tile buffer
_TB_QUANTUM = 1024  # keeps out-block sublane dim (TB//128) a multiple of 8


def _round_up(n, m):
    return ((n + m - 1) // m) * m


def _gates_to_h(gates):
    """LSTM cell with h_prev = c_prev = 0 (PyTorch gate order i,f,g,o).

    `gates` is the f32 accumulator (TB, 4H).  sigmoid/tanh are applied once
    over the full 4H width (single full-width EUP passes); the f gate
    multiplies c_prev == 0 so its value is never used."""
    H = gates.shape[-1] // 4
    sig = jax.nn.sigmoid(gates)          # i, o lanes used
    tng = jnp.tanh(gates)                # g lanes used
    i = sig[:, 0 * H:1 * H]
    g = tng[:, 2 * H:3 * H]
    o = sig[:, 3 * H:4 * H]
    c = i * g                            # f * c_prev == 0 exactly
    return o * jnp.tanh(c)


def cpg_kernel(x_ref, w0_ref, b0_ref, w1_ref, b1_ref, wfc_ref, bfc_ref, out_ref):
    # x arrives as f32; cast to bf16 in-kernel (idle VALU) for the MXU.
    x = x_ref[...].astype(jnp.bfloat16)                                 # (TB, 128)
    # LSTM layer 0: bf16 x / bf16 W, f32 accumulate, f32 elementwise.
    gates0 = jnp.dot(x, w0_ref[...], preferred_element_type=jnp.float32) + b0_ref[...]
    h0 = _gates_to_h(gates0)                                            # (TB, H) f32
    # LSTM layer 1.
    gates1 = jnp.dot(h0.astype(jnp.bfloat16), w1_ref[...],
                     preferred_element_type=jnp.float32) + b1_ref[...]
    h1 = _gates_to_h(gates1)                                            # (TB, H) f32
    # fc (Linear(H, 1)): N=1 matmul replaced by VPU multiply + lane reduction.
    out = jnp.sum(h1 * wfc_ref[...], axis=-1, keepdims=True) + bfc_ref[...]   # (TB, 1)
    out = jnp.maximum(out, 0.0)                                         # ReLU
    # Lane-dense store: (TB, 1) -> (TB//128, 128) so the writeback is
    # full-width vst + one contiguous DMA instead of 1-lane masked stores.
    out_ref[...] = out.reshape(out_ref.shape)


def _tile_rows(B_pad):
    """Pick the batch tile size TB for a 128-aligned padded batch."""
    if B_pad <= _TB_QUANTUM:
        return B_pad                      # single tile; block == full array
    num_tiles = pl.cdiv(B_pad, _TB_CAP)
    if num_tiles == 1:
        num_tiles = 2                     # v7x: give both TensorCores a tile
    return _round_up(pl.cdiv(B_pad, num_tiles), _TB_QUANTUM)


def cpg_predictor(x, params):
    """x: (B, 128) float32 -> (B,) float32."""
    B = x.shape[0]
    w0, b0, w1, b1, wfc, bfc = params

    # Pad only to the 128-lane quantum (<=127 rows) -- no TB-multiple padding.
    B_pad = _round_up(B, 128)
    if B_pad != B:
        x = jnp.pad(x, ((0, B_pad - B), (0, 0)))

    TB = _tile_rows(B_pad)
    grid = (pl.cdiv(B_pad, TB),)          # last tile may overhang; OOB rows masked

    out2d = pl.pallas_call(
        cpg_kernel,
        out_shape=jax.ShapeDtypeStruct((B_pad // 128, 128), jnp.float32),
        grid=grid,
        in_specs=[
            pl.BlockSpec((TB, INPUT_SIZE), lambda i: (i, 0)),              # x tile (f32), streamed
            pl.BlockSpec((INPUT_SIZE, 4 * HIDDEN), lambda i: (0, 0)),      # w0, VMEM-resident
            pl.BlockSpec((1, 4 * HIDDEN), lambda i: (0, 0)),               # b0
            pl.BlockSpec((HIDDEN, 4 * HIDDEN), lambda i: (0, 0)),          # w1
            pl.BlockSpec((1, 4 * HIDDEN), lambda i: (0, 0)),               # b1
            pl.BlockSpec((1, HIDDEN), lambda i: (0, 0)),                   # wfc (row)
            pl.BlockSpec((1, 1), lambda i: (0, 0)),                        # bfc
        ],
        out_specs=pl.BlockSpec((TB // 128, 128), lambda i: (i, 0)),        # lane-dense
        compiler_params=pltpu.CompilerParams(
            dimension_semantics=("parallel",),
            vmem_limit_bytes=48 * 1024 * 1024),
    )(x, w0, b0, w1, b1, wfc, bfc)
    return out2d.reshape(-1)[:B]   # .flatten() -> (B,), padded rows dropped


def init_params(key):
    """Deterministic synthetic init matching PyTorch's default U(-1/sqrt(H), 1/sqrt(H))."""
    bound = 1.0 / float(jnp.sqrt(jnp.float32(HIDDEN)))
    keys = jax.random.split(key, 8)

    def u(kk, shape):
        return jax.random.uniform(kk, shape, jnp.float32, -bound, bound)

    # LSTM layer 0
    w_ih0 = u(keys[0], (4 * HIDDEN, INPUT_SIZE))
    b_ih0 = u(keys[1], (4 * HIDDEN,))
    b_hh0 = u(keys[2], (4 * HIDDEN,))
    # LSTM layer 1 (input is hidden state of layer 0)
    w_ih1 = u(keys[3], (4 * HIDDEN, HIDDEN))
    b_ih1 = u(keys[4], (4 * HIDDEN,))
    b_hh1 = u(keys[5], (4 * HIDDEN,))
    # fc: Linear(HIDDEN, 1)
    w_fc = u(keys[6], (1, HIDDEN))
    b_fc = u(keys[7], (1,))

    # Pre-transpose weights, fold bias pairs, and cast matmul weights to bf16
    # (glue, outside the kernel).  Biases/fc stay f32 for the f32 epilogue.
    w0 = w_ih0.T.astype(jnp.bfloat16)        # (128, 4H) bf16
    b0 = (b_ih0 + b_hh0)[None, :]            # (1, 4H)   f32
    w1 = w_ih1.T.astype(jnp.bfloat16)        # (H, 4H)   bf16
    b1 = (b_ih1 + b_hh1)[None, :]            # (1, 4H)   f32
    wfc = w_fc                               # (1, H)    f32 (used as a row on the VPU)
    bfc = b_fc[None, :]                      # (1, 1)    f32
    return (w0, b0, w1, b1, wfc, bfc)


def _reference(x, params):
    """Pure-JAX reference of the same (bf16-input, f32-accumulate) math."""
    w0, b0, w1, b1, wfc, bfc = params
    xq = x.astype(jnp.bfloat16).astype(jnp.float32)
    w0f = w0.astype(jnp.float32)
    w1f = w1.astype(jnp.float32)
    g0 = jnp.dot(xq, w0f) + b0
    h0 = _gates_to_h(g0)
    g1 = jnp.dot(h0.astype(jnp.bfloat16).astype(jnp.float32), w1f) + b1
    h1 = _gates_to_h(g1)
    out = jnp.maximum(jnp.sum(h1 * wfc, axis=-1, keepdims=True) + bfc, 0.0)
    return out.reshape(-1)


if __name__ == "__main__":
    key = jax.random.PRNGKey(0)
    k_x, k_p, k_x2 = jax.random.split(key, 3)
    params = init_params(k_p)

    # Small-batch check (B=2 -> padded to 128, single full-array block).
    B = 2
    x = jax.random.normal(k_x, (B, INPUT_SIZE), dtype=jnp.float32)
    out = jax.block_until_ready(cpg_predictor(x, params))
    ref = _reference(x, params)
    assert out.shape == (B,), out.shape
    assert jnp.allclose(out, ref, atol=1e-4, rtol=1e-4), (out, ref)

    # Multi-tile check (exercises the batch grid, lane-dense output, and the
    # masked partial last block: B=2500 -> B_pad=2560, TB=2048, grid=(2,)).
    B2 = 2500
    x2 = jax.random.normal(k_x2, (B2, INPUT_SIZE), dtype=jnp.float32)
    out2 = jax.block_until_ready(cpg_predictor(x2, params))
    ref2 = _reference(x2, params)
    assert out2.shape == (B2,), out2.shape
    assert jnp.allclose(out2, ref2, atol=1e-4, rtol=1e-4)

    print("KERNEL_OK")
</pallas_src>

<mosaic_0001>
module attributes {stable_mosaic.version = 11 : i64} {
  func.func @cpg_kernel(%arg0: i32, %arg1: memref<128x128xf32, #tpu.memory_space<vmem>>, %arg2: memref<128x128xbf16, #tpu.memory_space<vmem>>, %arg3: memref<1x128xf32, #tpu.memory_space<vmem>>, %arg4: memref<32x128xbf16, #tpu.memory_space<vmem>>, %arg5: memref<1x128xf32, #tpu.memory_space<vmem>>, %arg6: memref<1x32xf32, #tpu.memory_space<vmem>>, %arg7: memref<1x1xf32, #tpu.memory_space<vmem>>, %arg8: memref<1x128xf32, #tpu.memory_space<vmem>>) attributes {dimension_semantics = [#tpu.dimension_semantics<parallel>], iteration_bounds = array<i64: 1>, scalar_prefetch = 0 : i64, scratch_operands = 0 : i64, tpu.core_type = #tpu.core_type<tc>, window_params = [{transform_indices = @transform_0, window_bounds = array<i64: 128, 128>}, {pipeline_mode = #tpu.pipeline_mode<synchronous>, transform_indices = @transform_1, window_bounds = array<i64: 128, 128>}, {pipeline_mode = #tpu.pipeline_mode<synchronous>, transform_indices = @transform_2, window_bounds = array<i64: 1, 128>}, {pipeline_mode = #tpu.pipeline_mode<synchronous>, transform_indices = @transform_3, window_bounds = array<i64: 32, 128>}, {pipeline_mode = #tpu.pipeline_mode<synchronous>, transform_indices = @transform_4, window_bounds = array<i64: 1, 128>}, {pipeline_mode = #tpu.pipeline_mode<synchronous>, transform_indices = @transform_5, window_bounds = array<i64: 1, 32>}, {pipeline_mode = #tpu.pipeline_mode<synchronous>, transform_indices = @transform_6, window_bounds = array<i64: 1, 1>}, {transform_indices = @transform_7, window_bounds = array<i64: 1, 128>}]} {
    %c0 = arith.constant 0 : index
    %c0_0 = arith.constant 0 : index
    %0 = vector.load %arg1[%c0, %c0_0] : memref<128x128xf32, #tpu.memory_space<vmem>>, vector<128x128xf32>
    %1 = arith.truncf %0 : vector<128x128xf32> to vector<128x128xbf16>
    %c0_1 = arith.constant 0 : index
    %c0_2 = arith.constant 0 : index
    %2 = vector.load %arg2[%c0_1, %c0_2] : memref<128x128xbf16, #tpu.memory_space<vmem>>, vector<128x128xbf16>
    %cst = arith.constant dense<0.000000e+00> : vector<128x128xf32>
    %3 = tpu.matmul %1, %2, %cst {dimension_numbers = #tpu.dot_dimension_numbers<[1], [0], [0], [1], [0, 0, 1, 1], [], []>} : vector<128x128xbf16>, vector<128x128xbf16>, vector<128x128xf32> -> vector<128x128xf32>
    %c0_3 = arith.constant 0 : index
    %c0_4 = arith.constant 0 : index
    %4 = vector.load %arg3[%c0_3, %c0_4] : memref<1x128xf32, #tpu.memory_space<vmem>>, vector<1x128xf32>
    %5 = vector.broadcast %4 : vector<1x128xf32> to vector<128x128xf32>
    %6 = arith.addf %3, %5 : vector<128x128xf32>
    %7 = arith.negf %6 : vector<128x128xf32>
    %8 = math.exp %7 : vector<128x128xf32>
    %cst_5 = arith.constant 1.000000e+00 : f32
    %9 = vector.broadcast %cst_5 : f32 to vector<128x128xf32>
    %10 = arith.addf %9, %8 : vector<128x128xf32>
    %11 = arith.divf %9, %10 : vector<128x128xf32>
    %12 = math.tanh %6 : vector<128x128xf32>
    %13 = vector.extract_strided_slice %11 {offsets = [0, 0], sizes = [128, 32], strides = [1, 1]} : vector<128x128xf32> to vector<128x32xf32>
    %14 = vector.extract_strided_slice %12 {offsets = [0, 64], sizes = [128, 32], strides = [1, 1]} : vector<128x128xf32> to vector<128x32xf32>
    %15 = vector.extract_strided_slice %11 {offsets = [0, 96], sizes = [128, 32], strides = [1, 1]} : vector<128x128xf32> to vector<128x32xf32>
    %16 = arith.mulf %13, %14 : vector<128x32xf32>
    %17 = math.tanh %16 : vector<128x32xf32>
    %18 = arith.mulf %15, %17 : vector<128x32xf32>
    %19 = arith.truncf %18 : vector<128x32xf32> to vector<128x32xbf16>
    %c0_6 = arith.constant 0 : index
    %c0_7 = arith.constant 0 : index
    %20 = vector.load %arg4[%c0_6, %c0_7] : memref<32x128xbf16, #tpu.memory_space<vmem>>, vector<32x128xbf16>
    %cst_8 = arith.constant dense<0.000000e+00> : vector<128x128xf32>
    %21 = tpu.matmul %19, %20, %cst_8 {dimension_numbers = #tpu.dot_dimension_numbers<[1], [0], [0], [1], [0, 0, 1, 1], [], []>} : vector<128x32xbf16>, vector<32x128xbf16>, vector<128x128xf32> -> vector<128x128xf32>
    %c0_9 = arith.constant 0 : index
    %c0_10 = arith.constant 0 : index
    %22 = vector.load %arg5[%c0_9, %c0_10] : memref<1x128xf32, #tpu.memory_space<vmem>>, vector<1x128xf32>
    %23 = vector.broadcast %22 : vector<1x128xf32> to vector<128x128xf32>
    %24 = arith.addf %21, %23 : vector<128x128xf32>
    %25 = arith.negf %24 : vector<128x128xf32>
    %26 = math.exp %25 : vector<128x128xf32>
    %cst_11 = arith.constant 1.000000e+00 : f32
    %27 = vector.broadcast %cst_11 : f32 to vector<128x128xf32>
    %28 = arith.addf %27, %26 : vector<128x128xf32>
    %29 = arith.divf %27, %28 : vector<128x128xf32>
    %30 = math.tanh %24 : vector<128x128xf32>
    %31 = vector.extract_strided_slice %29 {offsets = [0, 0], sizes = [128, 32], strides = [1, 1]} : vector<128x128xf32> to vector<128x32xf32>
    %32 = vector.extract_strided_slice %30 {offsets = [0, 64], sizes = [128, 32], strides = [1, 1]} : vector<128x128xf32> to vector<128x32xf32>
    %33 = vector.extract_strided_slice %29 {offsets = [0, 96], sizes = [128, 32], strides = [1, 1]} : vector<128x128xf32> to vector<128x32xf32>
    %34 = arith.mulf %31, %32 : vector<128x32xf32>
    %35 = math.tanh %34 : vector<128x32xf32>
    %36 = arith.mulf %33, %35 : vector<128x32xf32>
    %c0_12 = arith.constant 0 : index
    %c0_13 = arith.constant 0 : index
    %37 = vector.load %arg6[%c0_12, %c0_13] : memref<1x32xf32, #tpu.memory_space<vmem>>, vector<1x32xf32>
    %38 = vector.broadcast %37 : vector<1x32xf32> to vector<128x32xf32>
    %39 = arith.mulf %36, %38 : vector<128x32xf32>
    %cst_14 = arith.constant dense<0.000000e+00> : vector<128xf32>
    %40 = vector.multi_reduction <add>, %39, %cst_14 [1] : vector<128x32xf32> to vector<128xf32>
    %41 = vector.shape_cast %40 : vector<128xf32> to vector<128x1xf32>
    %c0_15 = arith.constant 0 : index
    %c0_16 = arith.constant 0 : index
    %42 = vector.load %arg7[%c0_15, %c0_16] : memref<1x1xf32, #tpu.memory_space<vmem>>, vector<1x1xf32>
    %43 = vector.broadcast %42 : vector<1x1xf32> to vector<128x1xf32>
    %44 = arith.addf %41, %43 : vector<128x1xf32>
    %cst_17 = arith.constant 0.000000e+00 : f32
    %45 = vector.broadcast %cst_17 : f32 to vector<128x1xf32>
    %46 = arith.maximumf %44, %45 : vector<128x1xf32>
    %47 = vector.shape_cast %46 : vector<128x1xf32> to vector<1x128xf32>
    %c0_18 = arith.constant 0 : index
    %c0_19 = arith.constant 0 : index
    %48 = vector.load %arg8[%c0_18, %c0_19] : memref<1x128xf32, #tpu.memory_space<vmem>>, vector<1x128xf32>
    tpu.vector_store %arg8[%c0_18, %c0_19], %47 {strides = array<i32>} : memref<1x128xf32, #tpu.memory_space<vmem>>, vector<1x128xf32>,
    return
  }
  func.func @transform_0(%arg0: i32) -> (i32, i32) {
    %c0_i32 = arith.constant 0 : i32
    %c0_i32_0 = arith.constant 0 : i32
    return %arg0, %c0_i32 : i32, i32
  }
  func.func @transform_1(%arg0: i32) -> (i32, i32) {
    %c0_i32 = arith.constant 0 : i32
    %c0_i32_0 = arith.constant 0 : i32
    %c0_i32_1 = arith.constant 0 : i32
    return %c0_i32, %c0_i32_0 : i32, i32
  }
  func.func @transform_2(%arg0: i32) -> (i32, i32) {
    %c0_i32 = arith.constant 0 : i32
    %c0_i32_0 = arith.constant 0 : i32
    %c0_i32_1 = arith.constant 0 : i32
    return %c0_i32, %c0_i32_0 : i32, i32
  }
  func.func @transform_3(%arg0: i32) -> (i32, i32) {
    %c0_i32 = arith.constant 0 : i32
    %c0_i32_0 = arith.constant 0 : i32
    %c0_i32_1 = arith.constant 0 : i32
    return %c0_i32, %c0_i32_0 : i32, i32
  }
  func.func @transform_4(%arg0: i32) -> (i32, i32) {
    %c0_i32 = arith.constant 0 : i32
    %c0_i32_0 = arith.constant 0 : i32
    %c0_i32_1 = arith.constant 0 : i32
    return %c0_i32, %c0_i32_0 : i32, i32
  }
  func.func @transform_5(%arg0: i32) -> (i32, i32) {
    %c0_i32 = arith.constant 0 : i32
    %c0_i32_0 = arith.constant 0 : i32
    %c0_i32_1 = arith.constant 0 : i32
    return %c0_i32, %c0_i32_0 : i32, i32
  }
  func.func @transform_6(%arg0: i32) -> (i32, i32) {
    %c0_i32 = arith.constant 0 : i32
    %c0_i32_0 = arith.constant 0 : i32
    %c0_i32_1 = arith.constant 0 : i32
    return %c0_i32, %c0_i32_0 : i32, i32
  }
  func.func @transform_7(%arg0: i32) -> (i32, i32) {
    %c0_i32 = arith.constant 0 : i32
    %c0_i32_0 = arith.constant 0 : i32
    return %arg0, %c0_i32 : i32, i32
  }
}

</mosaic_0001>

<llo_original>
// kernel: tpu_custom_call.1
$region0: #{tpu_custom_call.1}
  #allocation0 [shape = 'u32[]', space=smem, size = 0x4, offset = 0x4, fixed_abs, tag = 'smem constant byte address 0x4 - core index']
  #allocation1 [shape = 'u32[144,128]{1,0:T(1,128)}', space=vmem, size = 0x12000, scoped, tag = 'internal scratch']
  #allocation2 [shape = 'f32[1,1]{1,0:T(1,128)S(1)}', space=vmem, size = 0x200, scoped, tag = 'scoped memory for tpu_custom_call.1']
  %s0 = inlined_call_operand.hbm [shape: f32[128,128], index: 0, kind: input, shape index: {}]
  %s1 = inlined_call_operand.hbm [shape: bf16[128,128], index: 1, kind: input, shape index: {}]
  %s2 = inlined_call_operand.vmem [shape: f32[1,128], index: 2, kind: input, shape index: {}]
  %s3 = inlined_call_operand.hbm [shape: bf16[32,128], index: 3, kind: input, shape index: {}]
  %s4 = inlined_call_operand.vmem [shape: f32[1,128], index: 4, kind: input, shape index: {}]
  %s5 = inlined_call_operand.vmem [shape: f32[1,32], index: 5, kind: input, shape index: {}]
  %s6 = inlined_call_operand.<no memory space> [shape: f32[1,1], index: 6, kind: input, shape index: {}]
  %s7 = inlined_call_operand.hbm [shape: f32[1,128], index: 7, kind: output, shape index: {}]
  %s8 = sld [smem:[#allocation0]]
  $region50: #{tpu_custom_call.1} parent=0
    _
  %s10 = ssub.s32 1, %s8
  %s11 = scalar_select 0, %s10, %s8
  %v12 = vstv %s6
  %13 = vst [vmem:[#allocation2] sm:$0x1] %v12
  $region1: #{tpu_custom_call.1} parent=0
    #allocation3 [shape = 'u8[65536]{0}', space=vmem, size = 0x10000, scoped, tag = 'input window, operand 0, single buffered']
    #allocation4 [shape = 's32[1]{0}', space=sflag, size = 0x4, scoped, tag = 'scoped memory for tpu_custom_call.1']
    #allocation5 [shape = 's32[1]{0}', space=sflag, size = 0x4, scoped, tag = 'scoped memory for tpu_custom_call.1']
    #allocation6 [shape = 'u8[32768]{0}', space=vmem, size = 0x8000, scoped, tag = 'input window, operand 1, single buffered']
    #allocation7 [shape = 's32[1]{0}', space=sflag, size = 0x4, scoped, tag = 'scoped memory for tpu_custom_call.1']
    #allocation8 [shape = 'u8[8192]{0}', space=vmem, size = 0x2000, scoped, tag = 'input window, operand 3, single buffered']
    #allocation9 [shape = 'u8[512]{0}', space=vmem, size = 0x400, scoped, tag = 'output window, operand 0, single buffered']
    %14 = vsyncpa [#allocation4], 0
    %15 = vsyncpa [#allocation7], 0
    %16 = vsyncpa [#allocation5], 0
    // Predicated region
    $region2: #{tpu_custom_call.1} parent=1 // pred_check
      _
    $region3: #{tpu_custom_call.1} parent=1 // pred_check_branch
      %18 = sbr.rel (0) target = $region5
    $region4: #{tpu_custom_call.1} parent=1 // pred_region
      %s20 = ssub.s32 2048, 2048
      %21 = vsyncadd [#allocation4], %s20
      %s22 = sshll.u32 [#allocation3], 4
      %s23 = int_to_ptr.vmem [resolvable:$true] %s22
      %28 = dma.hbm_to_vmem [thread:$0]  %s0, 2048, %s23, [#allocation4], 128, 128, 8
    $region5: #{tpu_custom_call.1} parent=1 // pred_fallthru
      _
    // Predicated region
    $region6: #{tpu_custom_call.1} parent=1 // pred_check
      _
    $region7: #{tpu_custom_call.1} parent=1 // pred_check_branch
      %30 = sbr.rel (0) target = $region9
    $region8: #{tpu_custom_call.1} parent=1 // pred_region
      %s32 = ssub.s32 1024, 1024
      %33 = vsyncadd [#allocation7], %s32
      %s34 = sshll.u32 [#allocation6], 4
      %s35 = int_to_ptr.vmem [resolvable:$true] %s34
      %40 = dma.hbm_to_vmem [thread:$0]  %s1, 1024, %s35, [#allocation7], 64, 64, 4
    $region9: #{tpu_custom_call.1} parent=1 // pred_fallthru
      _
    // Predicated region
    $region10: #{tpu_custom_call.1} parent=1 // pred_check
      _
    $region11: #{tpu_custom_call.1} parent=1 // pred_check_branch
      %42 = sbr.rel (0) target = $region13
    $region12: #{tpu_custom_call.1} parent=1 // pred_region
      _
    $region13: #{tpu_custom_call.1} parent=1 // pred_fallthru
      _
    // Predicated region
    $region14: #{tpu_custom_call.1} parent=1 // pred_check
      _
    $region15: #{tpu_custom_call.1} parent=1 // pred_check_branch
      %44 = sbr.rel (0) target = $region17
    $region16: #{tpu_custom_call.1} parent=1 // pred_region
      %s46 = ssub.s32 256, 256
      %47 = vsyncadd [#allocation7], %s46
      %s48 = sshll.u32 [#allocation8], 4
      %s49 = int_to_ptr.vmem [resolvable:$true] %s48
      %54 = dma.hbm_to_vmem [thread:$0]  %s3, 256, %s49, [#allocation7], 64, 64, 4
    $region17: #{tpu_custom_call.1} parent=1 // pred_fallthru
      _
    // Predicated region
    $region18: #{tpu_custom_call.1} parent=1 // pred_check
      _
    $region19: #{tpu_custom_call.1} parent=1 // pred_check_branch
      %56 = sbr.rel (0) target = $region21
    $region20: #{tpu_custom_call.1} parent=1 // pred_region
      _
    $region21: #{tpu_custom_call.1} parent=1 // pred_fallthru
      _
    // Predicated region
    $region22: #{tpu_custom_call.1} parent=1 // pred_check
      _
    $region23: #{tpu_custom_call.1} parent=1 // pred_check_branch
      %58 = sbr.rel (0) target = $region25
    $region24: #{tpu_custom_call.1} parent=1 // pred_region
      _
    $region25: #{tpu_custom_call.1} parent=1 // pred_fallthru
      _
    // Predicated region
    $region26: #{tpu_custom_call.1} parent=1 // pred_check
      _
    $region27: #{tpu_custom_call.1} parent=1 // pred_check_branch
      %60 = sbr.rel (0) target = $region29
    $region28: #{tpu_custom_call.1} parent=1 // pred_region
      _
    $region29: #{tpu_custom_call.1} parent=1 // pred_fallthru
      _
    // Predicated region
    $region30: #{tpu_custom_call.1} parent=1 // pred_check
      _
    $region31: #{tpu_custom_call.1} parent=1 // pred_check_branch
      %62 = sbr.rel (0) target = $region33
    $region32: #{tpu_custom_call.1} parent=1 // pred_region
      %63 = dma.done [#allocation4], 2048
    $region33: #{tpu_custom_call.1} parent=1 // pred_fallthru
      _
    // Predicated region
    $region34: #{tpu_custom_call.1} parent=1 // pred_check
      _
    $region35: #{tpu_custom_call.1} parent=1 // pred_check_branch
      %65 = sbr.rel (0) target = $region37
    $region36: #{tpu_custom_call.1} parent=1 // pred_region
      %66 = dma.done [#allocation7], 1024
    $region37: #{tpu_custom_call.1} parent=1 // pred_fallthru
      _
    // Predicated region
    $region38: #{tpu_custom_call.1} parent=1 // pred_check
      _
    $region39: #{tpu_custom_call.1} parent=1 // pred_check_branch
      %68 = sbr.rel (0) target = $region41
    $region40: #{tpu_custom_call.1} parent=1 // pred_region
      %69 = dma.done [#allocation7], 256
    $region41: #{tpu_custom_call.1} parent=1 // pred_fallthru
      _
    %v71 = vld [vmem:[#allocation3] sm:$0xff]
    %v72 = vld [vmem:[#allocation3 + $0x8] sm:$0xff]
    %v73 = vld [vmem:[#allocation3 + $0x10] sm:$0xff]
    %v74 = vld [vmem:[#allocation3 + $0x18] sm:$0xff]
    %v75 = vld [vmem:[#allocation3 + $0x20] sm:$0xff]
    %v76 = vld [vmem:[#allocation3 + $0x28] sm:$0xff]
    %v77 = vld [vmem:[#allocation3 + $0x30] sm:$0xff]
    %v78 = vld [vmem:[#allocation3 + $0x38] sm:$0xff]
    %v79 = vld [vmem:[#allocation3 + $0x40] sm:$0xff]
    %v80 = vld [vmem:[#allocation3 + $0x48] sm:$0xff]
    %v81 = vld [vmem:[#allocation3 + $0x50] sm:$0xff]
    %v82 = vld [vmem:[#allocation3 + $0x58] sm:$0xff]
    %v83 = vld [vmem:[#allocation3 + $0x60] sm:$0xff]
    %v84 = vld [vmem:[#allocation3 + $0x68] sm:$0xff]
    %v85 = vld [vmem:[#allocation3 + $0x70] sm:$0xff]
    %v86 = vld [vmem:[#allocation3 + $0x78] sm:$0xff]
    %v87 = vpack.c.bf16 %v72, %v71
    %v88 = vpack.c.bf16 %v74, %v73
    %v89 = vpack.c.bf16 %v76, %v75
    %v90 = vpack.c.bf16 %v78, %v77
    %v91 = vpack.c.bf16 %v80, %v79
    %v92 = vpack.c.bf16 %v82, %v81
    %v93 = vpack.c.bf16 %v84, %v83
    %v94 = vpack.c.bf16 %v86, %v85
    %v95 = vld [vmem:[#allocation6] sm:$0xf]
    %v96 = vld [vmem:[#allocation6 + $0x4] sm:$0xf]
    %v97 = vld [vmem:[#allocation6 + $0x8] sm:$0xf]
    %v98 = vld [vmem:[#allocation6 + $0xc] sm:$0xf]
    %v99 = vld [vmem:[#allocation6 + $0x10] sm:$0xf]
    %v100 = vld [vmem:[#allocation6 + $0x14] sm:$0xf]
    %v101 = vld [vmem:[#allocation6 + $0x18] sm:$0xf]
    %v102 = vld [vmem:[#allocation6 + $0x1c] sm:$0xf]
    %v103 = vld [vmem:[#allocation6 + $0x20] sm:$0xf]
    %v104 = vld [vmem:[#allocation6 + $0x24] sm:$0xf]
    %v105 = vld [vmem:[#allocation6 + $0x28] sm:$0xf]
    %v106 = vld [vmem:[#allocation6 + $0x2c] sm:$0xf]
    %v107 = vld [vmem:[#allocation6 + $0x30] sm:$0xf]
    %v108 = vld [vmem:[#allocation6 + $0x34] sm:$0xf]
    %v109 = vld [vmem:[#allocation6 + $0x38] sm:$0xf]
    %v110 = vld [vmem:[#allocation6 + $0x3c] sm:$0xf]
    %v111 = vld [vmem:[%s2] sm:$0x1]
    %v113 = vlaneseq
    %v114 = vshrl.u32 %v113, 7
    %v115 = vsub.s32 0, %v114
    %v116 = vrot.slane %v111, %v115
    %v134 = vunpack.c.l.b16 %v95
    %v135 = vunpack.c.l.b16 %v96
    %v136 = vunpack.c.l.b16 %v97
    %v137 = vunpack.c.l.b16 %v98
    %v138 = vunpack.c.l.b16 %v99
    %v139 = vunpack.c.l.b16 %v100
    %v140 = vunpack.c.l.b16 %v101
    %v141 = vunpack.c.l.b16 %v102
    %v142 = vunpack.c.l.b16 %v103
    %v143 = vunpack.c.l.b16 %v104
    %v144 = vunpack.c.l.b16 %v105
    %v145 = vunpack.c.l.b16 %v106
    %v146 = vunpack.c.l.b16 %v107
    %v147 = vunpack.c.l.b16 %v108
    %v148 = vunpack.c.l.b16 %v109
    %v149 = vunpack.c.l.b16 %v110
    %v150 = vpack.c.b16 %v135, %v134
    %v151 = vpack.c.b16 %v137, %v136
    %v152 = vpack.c.b16 %v139, %v138
    %v153 = vpack.c.b16 %v141, %v140
    %v154 = vpack.c.b16 %v143, %v142
    %v155 = vpack.c.b16 %v145, %v144
    %v156 = vpack.c.b16 %v147, %v146
    %v157 = vpack.c.b16 %v149, %v148
    %166 = vmatprep.subr.bf16.mxu0 0
    %167 = vmatpush1.bf16.msra.mxu0 %v150
    %168 = vmatprep.subr.bf16.mxu0 0
    %169 = vmatpush1.bf16.msra.mxu0 %v151
    %170 = vmatprep.subr.bf16.mxu0 0
    %171 = vmatpush1.bf16.msra.mxu0 %v152
    %172 = vmatprep.subr.bf16.mxu0 0
    %173 = vmatpush1.bf16.msra.mxu0 %v153
    %174 = vmatprep.subr.bf16.mxu0 0
    %175 = vmatpush1.bf16.msra.mxu0 %v154
    %176 = vmatprep.subr.bf16.mxu0 0
    %177 = vmatpush1.bf16.msra.mxu0 %v155
    %178 = vmatprep.subr.bf16.mxu0 0
    %179 = vmatpush1.bf16.msra.mxu0 %v156
    %180 = vmatprep.subr.bf16.mxu0 0
    %181 = vmatpush1.bf16.msra.mxu0 %v157
    %182 = vmatprep.subr.bf16.mxu0 0
    %183 = vmatpush1.bf16.msra.mxu0 0
    %184 = vmatprep.subr.bf16.mxu0 0
    %185 = vmatpush1.bf16.msra.mxu0 0
    %186 = vmatprep.subr.bf16.mxu0 0
    %187 = vmatpush1.bf16.msra.mxu0 0
    %188 = vmatprep.subr.bf16.mxu0 0
    %189 = vmatpush1.bf16.msra.mxu0 0
    %190 = vmatprep.subr.bf16.mxu0 0
    %191 = vmatpush1.bf16.msra.mxu0 0
    %192 = vmatprep.subr.bf16.mxu0 0
    %193 = vmatpush1.bf16.msra.mxu0 0
    %194 = vmatprep.subr.bf16.mxu0 0
    %195 = vmatpush1.bf16.msra.mxu0 0
    %196 = vmatprep.subr.bf16.mxu0 0
    %197 = vmatpush1.bf16.msra.mxu0 0
    %198 = vmatprep.mubr.bf16.mxu0 0
    %199 = vmatmul.mubr.bf16.gmra.mrb[0].mxu0 %v87
    %v200 = vpop.f32.mrb[0].mxu0
    %v201 = vadd.f32 %v116, %v200
    %v202 = vpop.f32.mrb[0].mxu0
    %v203 = vpop.f32.mrb[0].mxu0
    %v204 = vadd.f32 %v116, %v203
    %v205 = vpop.f32.mrb[0].mxu0
    %206 = vmatprep.mubr.bf16.mxu0 0
    %207 = vmatmul.mubr.bf16.gmra.mrb[0].mxu0 %v88
    %v208 = vpop.f32.mrb[0].mxu0
    %v209 = vadd.f32 %v116, %v208
    %v210 = vpop.f32.mrb[0].mxu0
    %v211 = vpop.f32.mrb[0].mxu0
    %v212 = vadd.f32 %v116, %v211
    %v213 = vpop.f32.mrb[0].mxu0
    %214 = vmatprep.mubr.bf16.mxu0 0
    %215 = vmatmul.mubr.bf16.gmra.mrb[0].mxu0 %v89
    %v216 = vpop.f32.mrb[0].mxu0
    %v217 = vadd.f32 %v116, %v216
    %v218 = vpop.f32.mrb[0].mxu0
    %v219 = vpop.f32.mrb[0].mxu0
    %v220 = vadd.f32 %v116, %v219
    %v221 = vpop.f32.mrb[0].mxu0
    %222 = vmatprep.mubr.bf16.mxu0 0
    %223 = vmatmul.mubr.bf16.gmra.mrb[0].mxu0 %v90
    %v224 = vpop.f32.mrb[0].mxu0
    %v225 = vadd.f32 %v116, %v224
    %v226 = vpop.f32.mrb[0].mxu0
    %v227 = vpop.f32.mrb[0].mxu0
    %v228 = vadd.f32 %v116, %v227
    %v229 = vpop.f32.mrb[0].mxu0
    %230 = vmatprep.mubr.bf16.mxu0 0
    %231 = vmatmul.mubr.bf16.gmra.mrb[0].mxu0 %v91
    %v232 = vpop.f32.mrb[0].mxu0
    %v233 = vadd.f32 %v116, %v232
    %v234 = vpop.f32.mrb[0].mxu0
    %v235 = vpop.f32.mrb[0].mxu0
    %v236 = vadd.f32 %v116, %v235
    %v237 = vpop.f32.mrb[0].mxu0
    %238 = vmatprep.mubr.bf16.mxu0 0
    %239 = vmatmul.mubr.bf16.gmra.mrb[0].mxu0 %v92
    %v240 = vpop.f32.mrb[0].mxu0
    %v241 = vadd.f32 %v116, %v240
    %v242 = vpop.f32.mrb[0].mxu0
    %v243 = vpop.f32.mrb[0].mxu0
    %v244 = vadd.f32 %v116, %v243
    %v245 = vpop.f32.mrb[0].mxu0
    %246 = vmatprep.mubr.bf16.mxu0 0
    %247 = vmatmul.mubr.bf16.gmra.mrb[0].mxu0 %v93
    %v248 = vpop.f32.mrb[0].mxu0
    %v249 = vadd.f32 %v116, %v248
    %v250 = vpop.f32.mrb[0].mxu0
    %v251 = vpop.f32.mrb[0].mxu0
    %v252 = vadd.f32 %v116, %v251
    %v253 = vpop.f32.mrb[0].mxu0
    %254 = vmatprep.mubr.bf16.mxu0 0
    %255 = vmatmul.mubr.bf16.gmra.mrb[0].mxu0 %v94
    %v256 = vpop.f32.mrb[0].mxu0
    %v257 = vadd.f32 %v116, %v256
    %v258 = vpop.f32.mrb[0].mxu0
    %v259 = vpop.f32.mrb[0].mxu0
    %v260 = vadd.f32 %v116, %v259
    %v261 = vpop.f32.mrb[0].mxu0
    %262 = vdwg.mxu0
    %v263 = vxor.u32 %v201, 2147483648
    %v264 = vxor.u32 %v204, 2147483648
    %v265 = vxor.u32 %v209, 2147483648
    %v266 = vxor.u32 %v212, 2147483648
    %v267 = vxor.u32 %v217, 2147483648
    %v268 = vxor.u32 %v220, 2147483648
    %v269 = vxor.u32 %v225, 2147483648
    %v270 = vxor.u32 %v228, 2147483648
    %v271 = vxor.u32 %v233, 2147483648
    %v272 = vxor.u32 %v236, 2147483648
    %v273 = vxor.u32 %v241, 2147483648
    %v274 = vxor.u32 %v244, 2147483648
    %v275 = vxor.u32 %v249, 2147483648
    %v276 = vxor.u32 %v252, 2147483648
    %v277 = vxor.u32 %v257, 2147483648
    %v278 = vxor.u32 %v260, 2147483648
    %v279 = vmul.f32 %v263, 1.442695
    %v280 = vpow.pop %v279
    %v281 = vmul.f32 %v264, 1.442695
    %v282 = vpow.pop %v281
    %v283 = vmul.f32 %v265, 1.442695
    %v284 = vpow.pop %v283
    %v285 = vmul.f32 %v266, 1.442695
    %v286 = vpow.pop %v285
    %v287 = vmul.f32 %v267, 1.442695
    %v288 = vpow.pop %v287
    %v289 = vmul.f32 %v268, 1.442695
    %v290 = vpow.pop %v289
    %v291 = vmul.f32 %v269, 1.442695
    %v292 = vpow.pop %v291
    %v293 = vmul.f32 %v270, 1.442695
    %v294 = vpow.pop %v293
    %v295 = vmul.f32 %v271, 1.442695
    %v296 = vpow.pop %v295
    %v297 = vmul.f32 %v272, 1.442695
    %v298 = vpow.pop %v297
    %v299 = vmul.f32 %v273, 1.442695
    %v300 = vpow.pop %v299
    %v301 = vmul.f32 %v274, 1.442695
    %v302 = vpow.pop %v301
    %v303 = vmul.f32 %v275, 1.442695
    %v304 = vpow.pop %v303
    %v305 = vmul.f32 %v276, 1.442695
    %v306 = vpow.pop %v305
    %v307 = vmul.f32 %v277, 1.442695
    %v308 = vpow.pop %v307
    %v309 = vmul.f32 %v278, 1.442695
    %v310 = vpow.pop %v309
    %v311 = vadd.f32 %v280, 1.0
    %v312 = vadd.f32 %v282, 1.0
    %v313 = vadd.f32 %v284, 1.0
    %v314 = vadd.f32 %v286, 1.0
    %v315 = vadd.f32 %v288, 1.0
    %v316 = vadd.f32 %v290, 1.0
    %v317 = vadd.f32 %v292, 1.0
    %v318 = vadd.f32 %v294, 1.0
    %v319 = vadd.f32 %v296, 1.0
    %v320 = vadd.f32 %v298, 1.0
    %v321 = vadd.f32 %v300, 1.0
    %v322 = vadd.f32 %v302, 1.0
    %v323 = vadd.f32 %v304, 1.0
    %v324 = vadd.f32 %v306, 1.0
    %v325 = vadd.f32 %v308, 1.0
    %v326 = vadd.f32 %v310, 1.0
    %v327 = vrcp.pop %v311
    %v328 = vmul.f32 1.0, %v327
    %v329 = vrcp.pop %v312
    %v330 = vmul.f32 1.0, %v329
    %v331 = vrcp.pop %v313
    %v332 = vmul.f32 1.0, %v331
    %v333 = vrcp.pop %v314
    %v334 = vmul.f32 1.0, %v333
    %v335 = vrcp.pop %v315
    %v336 = vmul.f32 1.0, %v335
    %v337 = vrcp.pop %v316
    %v338 = vmul.f32 1.0, %v337
    %v339 = vrcp.pop %v317
    %v340 = vmul.f32 1.0, %v339
    %v341 = vrcp.pop %v318
    %v342 = vmul.f32 1.0, %v341
    %v343 = vrcp.pop %v319
    %v344 = vmul.f32 1.0, %v343
    %v345 = vrcp.pop %v320
    %v346 = vmul.f32 1.0, %v345
    %v347 = vrcp.pop %v321
    %v348 = vmul.f32 1.0, %v347
    %v349 = vrcp.pop %v322
    %v350 = vmul.f32 1.0, %v349
    %v351 = vrcp.pop %v323
    %v352 = vmul.f32 1.0, %v351
    %v353 = vrcp.pop %v324
    %v354 = vmul.f32 1.0, %v353
    %v355 = vrcp.pop %v325
    %v356 = vmul.f32 1.0, %v355
    %v357 = vrcp.pop %v326
    %v358 = vmul.f32 1.0, %v357
    %v359 = vtanh.pop %v201
    %v360 = vtanh.pop %v204
    %v361 = vtanh.pop %v209
    %v362 = vtanh.pop %v212
    %v363 = vtanh.pop %v217
    %v364 = vtanh.pop %v220
    %v365 = vtanh.pop %v225
    %v366 = vtanh.pop %v228
    %v367 = vtanh.pop %v233
    %v368 = vtanh.pop %v236
    %v369 = vtanh.pop %v241
    %v370 = vtanh.pop %v244
    %v371 = vtanh.pop %v249
    %v372 = vtanh.pop %v252
    %v373 = vtanh.pop %v257
    %v374 = vtanh.pop %v260
    %391 = vrot.lane.b32.xlu0 %v359, 64
    %v392 = vpop.permute.xlu0 %391
    %393 = vrot.lane.b32.xlu0 %v360, 64
    %v394 = vpop.permute.xlu0 %393
    %395 = vrot.lane.b32.xlu0 %v361, 64
    %v396 = vpop.permute.xlu0 %395
    %397 = vrot.lane.b32.xlu0 %v362, 64
    %v398 = vpop.permute.xlu0 %397
    %399 = vrot.lane.b32.xlu0 %v363, 64
    %v400 = vpop.permute.xlu0 %399
    %401 = vrot.lane.b32.xlu0 %v364, 64
    %v402 = vpop.permute.xlu0 %401
    %403 = vrot.lane.b32.xlu0 %v365, 64
    %v404 = vpop.permute.xlu0 %403
    %405 = vrot.lane.b32.xlu0 %v366, 64
    %v406 = vpop.permute.xlu0 %405
    %407 = vrot.lane.b32.xlu0 %v367, 64
    %v408 = vpop.permute.xlu0 %407
    %409 = vrot.lane.b32.xlu0 %v368, 64
    %v410 = vpop.permute.xlu0 %409
    %411 = vrot.lane.b32.xlu0 %v369, 64
    %v412 = vpop.permute.xlu0 %411
    %413 = vrot.lane.b32.xlu0 %v370, 64
    %v414 = vpop.permute.xlu0 %413
    %415 = vrot.lane.b32.xlu0 %v371, 64
    %v416 = vpop.permute.xlu0 %415
    %417 = vrot.lane.b32.xlu0 %v372, 64
    %v418 = vpop.permute.xlu0 %417
    %419 = vrot.lane.b32.xlu0 %v373, 64
    %v420 = vpop.permute.xlu0 %419
    %421 = vrot.lane.b32.xlu0 %v374, 64
    %v422 = vpop.permute.xlu0 %421
    %v439 = vmul.f32 %v328, %v392
    %v440 = vmul.f32 %v330, %v394
    %v441 = vmul.f32 %v332, %v396
    %v442 = vmul.f32 %v334, %v398
    %v443 = vmul.f32 %v336, %v400
    %v444 = vmul.f32 %v338, %v402
    %v445 = vmul.f32 %v340, %v404
    %v446 = vmul.f32 %v342, %v406
    %v447 = vmul.f32 %v344, %v408
    %v448 = vmul.f32 %v346, %v410
    %v449 = vmul.f32 %v348, %v412
    %v450 = vmul.f32 %v350, %v414
    %v451 = vmul.f32 %v352, %v416
    %v452 = vmul.f32 %v354, %v418
    %v453 = vmul.f32 %v356, %v420
    %v454 = vmul.f32 %v358, %v422
    %v455 = vtanh.pop %v439
    %v456 = vtanh.pop %v440
    %v457 = vtanh.pop %v441
    %v458 = vtanh.pop %v442
    %v459 = vtanh.pop %v443
    %v460 = vtanh.pop %v444
    %v461 = vtanh.pop %v445
    %v462 = vtanh.pop %v446
    %v463 = vtanh.pop %v447
    %v464 = vtanh.pop %v448
    %v465 = vtanh.pop %v449
    %v466 = vtanh.pop %v450
    %v467 = vtanh.pop %v451
    %v468 = vtanh.pop %v452
    %v469 = vtanh.pop %v453
    %v470 = vtanh.pop %v454
    %487 = vrot.lane.b32.xlu0 %v455, 96
    %v488 = vpop.permute.xlu0 %487
    %489 = vrot.lane.b32.xlu0 %v456, 96
    %v490 = vpop.permute.xlu0 %489
    %491 = vrot.lane.b32.xlu0 %v457, 96
    %v492 = vpop.permute.xlu0 %491
    %493 = vrot.lane.b32.xlu0 %v458, 96
    %v494 = vpop.permute.xlu0 %493
    %495 = vrot.lane.b32.xlu0 %v459, 96
    %v496 = vpop.permute.xlu0 %495
    %497 = vrot.lane.b32.xlu0 %v460, 96
    %v498 = vpop.permute.xlu0 %497
    %499 = vrot.lane.b32.xlu0 %v461, 96
    %v500 = vpop.permute.xlu0 %499
    %501 = vrot.lane.b32.xlu0 %v462, 96
    %v502 = vpop.permute.xlu0 %501
    %503 = vrot.lane.b32.xlu0 %v463, 96
    %v504 = vpop.permute.xlu0 %503
    %505 = vrot.lane.b32.xlu0 %v464, 96
    %v506 = vpop.permute.xlu0 %505
    %507 = vrot.lane.b32.xlu0 %v465, 96
    %v508 = vpop.permute.xlu0 %507
    %509 = vrot.lane.b32.xlu0 %v466, 96
    %v510 = vpop.permute.xlu0 %509
    %511 = vrot.lane.b32.xlu0 %v467, 96
    %v512 = vpop.permute.xlu0 %511
    %513 = vrot.lane.b32.xlu0 %v468, 96
    %v514 = vpop.permute.xlu0 %513
    %515 = vrot.lane.b32.xlu0 %v469, 96
    %v516 = vpop.permute.xlu0 %515
    %517 = vrot.lane.b32.xlu0 %v470, 96
    %v518 = vpop.permute.xlu0 %517
    %v535 = vmul.f32 %v328, %v488
    %v536 = vmul.f32 %v330, %v490
    %v537 = vmul.f32 %v332, %v492
    %v538 = vmul.f32 %v334, %v494
    %v539 = vmul.f32 %v336, %v496
    %v540 = vmul.f32 %v338, %v498
    %v541 = vmul.f32 %v340, %v500
    %v542 = vmul.f32 %v342, %v502
    %v543 = vmul.f32 %v344, %v504
    %v544 = vmul.f32 %v346, %v506
    %v545 = vmul.f32 %v348, %v508
    %v546 = vmul.f32 %v350, %v510
    %v547 = vmul.f32 %v352, %v512
    %v548 = vmul.f32 %v354, %v514
    %v549 = vmul.f32 %v356, %v516
    %v550 = vmul.f32 %v358, %v518
    %v551 = vpack.c.bf16 %v536, %v535
    %v552 = vpack.c.bf16 %v538, %v537
    %v553 = vpack.c.bf16 %v540, %v539
    %v554 = vpack.c.bf16 %v542, %v541
    %v555 = vpack.c.bf16 %v544, %v543
    %v556 = vpack.c.bf16 %v546, %v545
    %v557 = vpack.c.bf16 %v548, %v547
    %v558 = vpack.c.bf16 %v550, %v549
    %v559 = vld [vmem:[#allocation8] sm:$0xf]
    %v560 = vld [vmem:[#allocation8 + $0x4] sm:$0xf]
    %v561 = vld [vmem:[#allocation8 + $0x8] sm:$0xf]
    %v562 = vld [vmem:[#allocation8 + $0xc] sm:$0xf]
    %v563 = vld [vmem:[%s4] sm:$0x1]
    %v565 = vlaneseq
    %v566 = vshrl.u32 %v565, 7
    %v567 = vsub.s32 0, %v566
    %v568 = vrot.slane %v563, %v567
    %578 = vrot.lane.b32.xlu0 %v551, 32
    %v579 = vpop.permute.xlu0 %578
    %580 = vrot.lane.b32.xlu0 %v552, 32
    %v581 = vpop.permute.xlu0 %580
    %582 = vrot.lane.b32.xlu0 %v553, 32
    %v583 = vpop.permute.xlu0 %582
    %584 = vrot.lane.b32.xlu0 %v554, 32
    %v585 = vpop.permute.xlu0 %584
    %586 = vrot.lane.b32.xlu0 %v555, 32
    %v587 = vpop.permute.xlu0 %586
    %588 = vrot.lane.b32.xlu0 %v556, 32
    %v589 = vpop.permute.xlu0 %588
    %590 = vrot.lane.b32.xlu0 %v557, 32
    %v591 = vpop.permute.xlu0 %590
    %592 = vrot.lane.b32.xlu0 %v558, 32
    %v593 = vpop.permute.xlu0 %592
    %v598 = vunpack.c.l.b16 %v559
    %v599 = vunpack.c.l.b16 %v560
    %v600 = vunpack.c.l.b16 %v561
    %v601 = vunpack.c.l.b16 %v562
    %v602 = vpack.c.b16 %v599, %v598
    %v603 = vpack.c.b16 %v601, %v600
    %vm606 = vcmask 261120
    %v608 = vsel %vm606, %v579, 0
    %v611 = vsel %vm606, %v581, 0
    %v614 = vsel %vm606, %v583, 0
    %v617 = vsel %vm606, %v585, 0
    %v620 = vsel %vm606, %v587, 0
    %v623 = vsel %vm606, %v589, 0
    %v626 = vsel %vm606, %v591, 0
    %v629 = vsel %vm606, %v593, 0
    %631 = vmatprep.subr.bf16.mxu0 0
    %632 = vmatpush1.bf16.msra.mxu0 %v602
    %633 = vmatprep.subr.bf16.mxu0 0
    %634 = vmatpush1.bf16.msra.mxu0 %v603
    %635 = vmatprep.subr.bf16.mxu0 0
    %636 = vmatpush1.bf16.msra.mxu0 0
    %637 = vmatprep.subr.bf16.mxu0 0
    %638 = vmatpush1.bf16.msra.mxu0 0
    %639 = vmatprep.subr.bf16.mxu0 0
    %640 = vmatpush1.bf16.msra.mxu0 0
    %641 = vmatprep.subr.bf16.mxu0 0
    %642 = vmatpush1.bf16.msra.mxu0 0
    %643 = vmatprep.subr.bf16.mxu0 0
    %644 = vmatpush1.bf16.msra.mxu0 0
    %645 = vmatprep.subr.bf16.mxu0 0
    %646 = vmatpush1.bf16.msra.mxu0 0
    %647 = vmatprep.subr.bf16.mxu0 0
    %648 = vmatpush1.bf16.msra.mxu0 0
    %649 = vmatprep.subr.bf16.mxu0 0
    %650 = vmatpush1.bf16.msra.mxu0 0
    %651 = vmatprep.subr.bf16.mxu0 0
    %652 = vmatpush1.bf16.msra.mxu0 0
    %653 = vmatprep.subr.bf16.mxu0 0
    %654 = vmatpush1.bf16.msra.mxu0 0
    %655 = vmatprep.subr.bf16.mxu0 0
    %656 = vmatpush1.bf16.msra.mxu0 0
    %657 = vmatprep.subr.bf16.mxu0 0
    %658 = vmatpush1.bf16.msra.mxu0 0
    %659 = vmatprep.subr.bf16.mxu0 0
    %660 = vmatpush1.bf16.msra.mxu0 0
    %661 = vmatprep.subr.bf16.mxu0 0
    %662 = vmatpush1.bf16.msra.mxu0 0
    %663 = vmatprep.mubr.bf16.mxu0 0
    %664 = vmatmul.mubr.bf16.gmra.mrb[0].mxu0 %v608
    %v665 = vpop.f32.mrb[0].mxu0
    %v666 = vadd.f32 %v568, %v665
    %v667 = vpop.f32.mrb[0].mxu0
    %v668 = vpop.f32.mrb[0].mxu0
    %v669 = vadd.f32 %v568, %v668
    %v670 = vpop.f32.mrb[0].mxu0
    %671 = vmatprep.mubr.bf16.mxu0 0
    %672 = vmatmul.mubr.bf16.gmra.mrb[0].mxu0 %v611
    %v673 = vpop.f32.mrb[0].mxu0
    %v674 = vadd.f32 %v568, %v673
    %v675 = vpop.f32.mrb[0].mxu0
    %v676 = vpop.f32.mrb[0].mxu0
    %v677 = vadd.f32 %v568, %v676
    %v678 = vpop.f32.mrb[0].mxu0
    %679 = vmatprep.mubr.bf16.mxu0 0
    %680 = vmatmul.mubr.bf16.gmra.mrb[0].mxu0 %v614
    %v681 = vpop.f32.mrb[0].mxu0
    %v682 = vadd.f32 %v568, %v681
    %v683 = vpop.f32.mrb[0].mxu0
    %v684 = vpop.f32.mrb[0].mxu0
    %v685 = vadd.f32 %v568, %v684
    %v686 = vpop.f32.mrb[0].mxu0
    %687 = vmatprep.mubr.bf16.mxu0 0
    %688 = vmatmul.mubr.bf16.gmra.mrb[0].mxu0 %v617
    %v689 = vpop.f32.mrb[0].mxu0
    %v690 = vadd.f32 %v568, %v689
    %v691 = vpop.f32.mrb[0].mxu0
    %v692 = vpop.f32.mrb[0].mxu0
    %v693 = vadd.f32 %v568, %v692
    %v694 = vpop.f32.mrb[0].mxu0
    %695 = vmatprep.mubr.bf16.mxu0 0
    %696 = vmatmul.mubr.bf16.gmra.mrb[0].mxu0 %v620
    %v697 = vpop.f32.mrb[0].mxu0
    %v698 = vadd.f32 %v568, %v697
    %v699 = vpop.f32.mrb[0].mxu0
    %v700 = vpop.f32.mrb[0].mxu0
    %v701 = vadd.f32 %v568, %v700
    %v702 = vpop.f32.mrb[0].mxu0
    %703 = vmatprep.mubr.bf16.mxu0 0
    %704 = vmatmul.mubr.bf16.gmra.mrb[0].mxu0 %v623
    %v705 = vpop.f32.mrb[0].mxu0
    %v706 = vadd.f32 %v568, %v705
    %v707 = vpop.f32.mrb[0].mxu0
    %v708 = vpop.f32.mrb[0].mxu0
    %v709 = vadd.f32 %v568, %v708
    %v710 = vpop.f32.mrb[0].mxu0
    %711 = vmatprep.mubr.bf16.mxu0 0
    %712 = vmatmul.mubr.bf16.gmra.mrb[0].mxu0 %v626
    %v713 = vpop.f32.mrb[0].mxu0
    %v714 = vadd.f32 %v568, %v713
    %v715 = vpop.f32.mrb[0].mxu0
    %v716 = vpop.f32.mrb[0].mxu0
    %v717 = vadd.f32 %v568, %v716
    %v718 = vpop.f32.mrb[0].mxu0
    %719 = vmatprep.mubr.bf16.mxu0 0
    %720 = vmatmul.mubr.bf16.gmra.mrb[0].mxu0 %v629
    %v721 = vpop.f32.mrb[0].mxu0
    %v722 = vadd.f32 %v568, %v721
    %v723 = vpop.f32.mrb[0].mxu0
    %v724 = vpop.f32.mrb[0].mxu0
    %v725 = vadd.f32 %v568, %v724
    %v726 = vpop.f32.mrb[0].mxu0
    %727 = vdwg.mxu0
    %v728 = vxor.u32 %v666, 2147483648
    %v729 = vxor.u32 %v669, 2147483648
    %v730 = vxor.u32 %v674, 2147483648
    %v731 = vxor.u32 %v677, 2147483648
    %v732 = vxor.u32 %v682, 2147483648
    %v733 = vxor.u32 %v685, 2147483648
    %v734 = vxor.u32 %v690, 2147483648
    %v735 = vxor.u32 %v693, 2147483648
    %v736 = vxor.u32 %v698, 2147483648
    %v737 = vxor.u32 %v701, 2147483648
    %v738 = vxor.u32 %v706, 2147483648
    %v739 = vxor.u32 %v709, 2147483648
    %v740 = vxor.u32 %v714, 2147483648
    %v741 = vxor.u32 %v717, 2147483648
    %v742 = vxor.u32 %v722, 2147483648
    %v743 = vxor.u32 %v725, 2147483648
    %v744 = vmul.f32 %v728, 1.442695
    %v745 = vpow.pop %v744
    %v746 = vmul.f32 %v729, 1.442695
    %v747 = vpow.pop %v746
    %v748 = vmul.f32 %v730, 1.442695
    %v749 = vpow.pop %v748
    %v750 = vmul.f32 %v731, 1.442695
    %v751 = vpow.pop %v750
    %v752 = vmul.f32 %v732, 1.442695
    %v753 = vpow.pop %v752
    %v754 = vmul.f32 %v733, 1.442695
    %v755 = vpow.pop %v754
    %v756 = vmul.f32 %v734, 1.442695
    %v757 = vpow.pop %v756
    %v758 = vmul.f32 %v735, 1.442695
    %v759 = vpow.pop %v758
    %v760 = vmul.f32 %v736, 1.442695
    %v761 = vpow.pop %v760
    %v762 = vmul.f32 %v737, 1.442695
    %v763 = vpow.pop %v762
    %v764 = vmul.f32 %v738, 1.442695
    %v765 = vpow.pop %v764
    %v766 = vmul.f32 %v739, 1.442695
    %v767 = vpow.pop %v766
    %v768 = vmul.f32 %v740, 1.442695
    %v769 = vpow.pop %v768
    %v770 = vmul.f32 %v741, 1.442695
    %v771 = vpow.pop %v770
    %v772 = vmul.f32 %v742, 1.442695
    %v773 = vpow.pop %v772
    %v774 = vmul.f32 %v743, 1.442695
    %v775 = vpow.pop %v774
    %v776 = vadd.f32 %v745, 1.0
    %v777 = vadd.f32 %v747, 1.0
    %v778 = vadd.f32 %v749, 1.0
    %v779 = vadd.f32 %v751, 1.0
    %v780 = vadd.f32 %v753, 1.0
    %v781 = vadd.f32 %v755, 1.0
    %v782 = vadd.f32 %v757, 1.0
    %v783 = vadd.f32 %v759, 1.0
    %v784 = vadd.f32 %v761, 1.0
    %v785 = vadd.f32 %v763, 1.0
    %v786 = vadd.f32 %v765, 1.0
    %v787 = vadd.f32 %v767, 1.0
    %v788 = vadd.f32 %v769, 1.0
    %v789 = vadd.f32 %v771, 1.0
    %v790 = vadd.f32 %v773, 1.0
    %v791 = vadd.f32 %v775, 1.0
    %v792 = vrcp.pop %v776
    %v793 = vmul.f32 1.0, %v792
    %v794 = vrcp.pop %v777
    %v795 = vmul.f32 1.0, %v794
    %v796 = vrcp.pop %v778
    %v797 = vmul.f32 1.0, %v796
    %v798 = vrcp.pop %v779
    %v799 = vmul.f32 1.0, %v798
    %v800 = vrcp.pop %v780
    %v801 = vmul.f32 1.0, %v800
    %v802 = vrcp.pop %v781
    %v803 = vmul.f32 1.0, %v802
    %v804 = vrcp.pop %v782
    %v805 = vmul.f32 1.0, %v804
    %v806 = vrcp.pop %v783
    %v807 = vmul.f32 1.0, %v806
    %v808 = vrcp.pop %v784
    %v809 = vmul.f32 1.0, %v808
    %v810 = vrcp.pop %v785
    %v811 = vmul.f32 1.0, %v810
    %v812 = vrcp.pop %v786
    %v813 = vmul.f32 1.0, %v812
    %v814 = vrcp.pop %v787
    %v815 = vmul.f32 1.0, %v814
    %v816 = vrcp.pop %v788
    %v817 = vmul.f32 1.0, %v816
    %v818 = vrcp.pop %v789
    %v819 = vmul.f32 1.0, %v818
    %v820 = vrcp.pop %v790
    %v821 = vmul.f32 1.0, %v820
    %v822 = vrcp.pop %v791
    %v823 = vmul.f32 1.0, %v822
    %v824 = vtanh.pop %v666
    %v825 = vtanh.pop %v669
    %v826 = vtanh.pop %v674
    %v827 = vtanh.pop %v677
    %v828 = vtanh.pop %v682
    %v829 = vtanh.pop %v685
    %v830 = vtanh.pop %v690
    %v831 = vtanh.pop %v693
    %v832 = vtanh.pop %v698
    %v833 = vtanh.pop %v701
    %v834 = vtanh.pop %v706
    %v835 = vtanh.pop %v709
    %v836 = vtanh.pop %v714
    %v837 = vtanh.pop %v717
    %v838 = vtanh.pop %v722
    %v839 = vtanh.pop %v725
    %856 = vrot.lane.b32.xlu0 %v824, 64
    %v857 = vpop.permute.xlu0 %856
    %858 = vrot.lane.b32.xlu0 %v825, 64
    %v859 = vpop.permute.xlu0 %858
    %860 = vrot.lane.b32.xlu0 %v826, 64
    %v861 = vpop.permute.xlu0 %860
    %862 = vrot.lane.b32.xlu0 %v827, 64
    %v863 = vpop.permute.xlu0 %862
    %864 = vrot.lane.b32.xlu0 %v828, 64
    %v865 = vpop.permute.xlu0 %864
    %866 = vrot.lane.b32.xlu0 %v829, 64
    %v867 = vpop.permute.xlu0 %866
    %868 = vrot.lane.b32.xlu0 %v830, 64
    %v869 = vpop.permute.xlu0 %868
    %870 = vrot.lane.b32.xlu0 %v831, 64
    %v871 = vpop.permute.xlu0 %870
    %872 = vrot.lane.b32.xlu0 %v832, 64
    %v873 = vpop.permute.xlu0 %872
    %874 = vrot.lane.b32.xlu0 %v833, 64
    %v875 = vpop.permute.xlu0 %874
    %876 = vrot.lane.b32.xlu0 %v834, 64
    %v877 = vpop.permute.xlu0 %876
    %878 = vrot.lane.b32.xlu0 %v835, 64
    %v879 = vpop.permute.xlu0 %878
    %880 = vrot.lane.b32.xlu0 %v836, 64
    %v881 = vpop.permute.xlu0 %880
    %882 = vrot.lane.b32.xlu0 %v837, 64
    %v883 = vpop.permute.xlu0 %882
    %884 = vrot.lane.b32.xlu0 %v838, 64
    %v885 = vpop.permute.xlu0 %884
    %886 = vrot.lane.b32.xlu0 %v839, 64
    %v887 = vpop.permute.xlu0 %886
    %v904 = vmul.f32 %v793, %v857
    %v905 = vmul.f32 %v795, %v859
    %v906 = vmul.f32 %v797, %v861
    %v907 = vmul.f32 %v799, %v863
    %v908 = vmul.f32 %v801, %v865
    %v909 = vmul.f32 %v803, %v867
    %v910 = vmul.f32 %v805, %v869
    %v911 = vmul.f32 %v807, %v871
    %v912 = vmul.f32 %v809, %v873
    %v913 = vmul.f32 %v811, %v875
    %v914 = vmul.f32 %v813, %v877
    %v915 = vmul.f32 %v815, %v879
    %v916 = vmul.f32 %v817, %v881
    %v917 = vmul.f32 %v819, %v883
    %v918 = vmul.f32 %v821, %v885
    %v919 = vmul.f32 %v823, %v887
    %v920 = vtanh.pop %v904
    %v921 = vtanh.pop %v905
    %v922 = vtanh.pop %v906
    %v923 = vtanh.pop %v907
    %v924 = vtanh.pop %v908
    %v925 = vtanh.pop %v909
    %v926 = vtanh.pop %v910
    %v927 = vtanh.pop %v911
    %v928 = vtanh.pop %v912
    %v929 = vtanh.pop %v913
    %v930 = vtanh.pop %v914
    %v931 = vtanh.pop %v915
    %v932 = vtanh.pop %v916
    %v933 = vtanh.pop %v917
    %v934 = vtanh.pop %v918
    %v935 = vtanh.pop %v919
    %952 = vrot.lane.b32.xlu0 %v920, 96
    %v953 = vpop.permute.xlu0 %952
    %954 = vrot.lane.b32.xlu0 %v921, 96
    %v955 = vpop.permute.xlu0 %954
    %956 = vrot.lane.b32.xlu0 %v922, 96
    %v957 = vpop.permute.xlu0 %956
    %958 = vrot.lane.b32.xlu0 %v923, 96
    %v959 = vpop.permute.xlu0 %958
    %960 = vrot.lane.b32.xlu0 %v924, 96
    %v961 = vpop.permute.xlu0 %960
    %962 = vrot.lane.b32.xlu0 %v925, 96
    %v963 = vpop.permute.xlu0 %962
    %964 = vrot.lane.b32.xlu0 %v926, 96
    %v965 = vpop.permute.xlu0 %964
    %966 = vrot.lane.b32.xlu0 %v927, 96
    %v967 = vpop.permute.xlu0 %966
    %968 = vrot.lane.b32.xlu0 %v928, 96
    %v969 = vpop.permute.xlu0 %968
    %970 = vrot.lane.b32.xlu0 %v929, 96
    %v971 = vpop.permute.xlu0 %970
    %972 = vrot.lane.b32.xlu0 %v930, 96
    %v973 = vpop.permute.xlu0 %972
    %974 = vrot.lane.b32.xlu0 %v931, 96
    %v975 = vpop.permute.xlu0 %974
    %976 = vrot.lane.b32.xlu0 %v932, 96
    %v977 = vpop.permute.xlu0 %976
    %978 = vrot.lane.b32.xlu0 %v933, 96
    %v979 = vpop.permute.xlu0 %978
    %980 = vrot.lane.b32.xlu0 %v934, 96
    %v981 = vpop.permute.xlu0 %980
    %982 = vrot.lane.b32.xlu0 %v935, 96
    %v983 = vpop.permute.xlu0 %982
    %v1000 = vmul.f32 %v793, %v953
    %v1001 = vmul.f32 %v795, %v955
    %v1002 = vmul.f32 %v797, %v957
    %v1003 = vmul.f32 %v799, %v959
    %v1004 = vmul.f32 %v801, %v961
    %v1005 = vmul.f32 %v803, %v963
    %v1006 = vmul.f32 %v805, %v965
    %v1007 = vmul.f32 %v807, %v967
    %v1008 = vmul.f32 %v809, %v969
    %v1009 = vmul.f32 %v811, %v971
    %v1010 = vmul.f32 %v813, %v973
    %v1011 = vmul.f32 %v815, %v975
    %v1012 = vmul.f32 %v817, %v977
    %v1013 = vmul.f32 %v819, %v979
    %v1014 = vmul.f32 %v821, %v981
    %v1015 = vmul.f32 %v823, %v983
    %v1016 = vld [vmem:[%s5] sm:$0x1]
    %v1018 = vlaneseq
    %v1019 = vshrl.u32 %v1018, 7
    %v1020 = vsub.s32 0, %v1019
    %v1021 = vrot.slane %v1016, %v1020
    %1022 = vrot.lane.b32.xlu0 %v1021, 96
    %v1023 = vpop.permute.xlu0 %1022
    %v1025 = vmul.f32 %v1000, %v1023
    %v1026 = vmul.f32 %v1001, %v1023
    %v1027 = vmul.f32 %v1002, %v1023
    %v1028 = vmul.f32 %v1003, %v1023
    %v1029 = vmul.f32 %v1004, %v1023
    %v1030 = vmul.f32 %v1005, %v1023
    %v1031 = vmul.f32 %v1006, %v1023
    %v1032 = vmul.f32 %v1007, %v1023
    %v1033 = vmul.f32 %v1008, %v1023
    %v1034 = vmul.f32 %v1009, %v1023
    %v1035 = vmul.f32 %v1010, %v1023
    %v1036 = vmul.f32 %v1011, %v1023
    %v1037 = vmul.f32 %v1012, %v1023
    %v1038 = vmul.f32 %v1013, %v1023
    %v1039 = vmul.f32 %v1014, %v1023
    %v1040 = vmul.f32 %v1015, %v1023
    %1057 = vrot.lane.b32.xlu0 %v1025, 32
    %v1058 = vpop.permute.xlu0 %1057
    %1059 = vrot.lane.b32.xlu0 %v1026, 32
    %v1060 = vpop.permute.xlu0 %1059
    %1061 = vrot.lane.b32.xlu0 %v1027, 32
    %v1062 = vpop.permute.xlu0 %1061
    %1063 = vrot.lane.b32.xlu0 %v1028, 32
    %v1064 = vpop.permute.xlu0 %1063
    %1065 = vrot.lane.b32.xlu0 %v1029, 32
    %v1066 = vpop.permute.xlu0 %1065
    %1067 = vrot.lane.b32.xlu0 %v1030, 32
    %v1068 = vpop.permute.xlu0 %1067
    %1069 = vrot.lane.b32.xlu0 %v1031, 32
    %v1070 = vpop.permute.xlu0 %1069
    %1071 = vrot.lane.b32.xlu0 %v1032, 32
    %v1072 = vpop.permute.xlu0 %1071
    %1073 = vrot.lane.b32.xlu0 %v1033, 32
    %v1074 = vpop.permute.xlu0 %1073
    %1075 = vrot.lane.b32.xlu0 %v1034, 32
    %v1076 = vpop.permute.xlu0 %1075
    %1077 = vrot.lane.b32.xlu0 %v1035, 32
    %v1078 = vpop.permute.xlu0 %1077
    %1079 = vrot.lane.b32.xlu0 %v1036, 32
    %v1080 = vpop.permute.xlu0 %1079
    %1081 = vrot.lane.b32.xlu0 %v1037, 32
    %v1082 = vpop.permute.xlu0 %1081
    %1083 = vrot.lane.b32.xlu0 %v1038, 32
    %v1084 = vpop.permute.xlu0 %1083
    %1085 = vrot.lane.b32.xlu0 %v1039, 32
    %v1086 = vpop.permute.xlu0 %1085
    %1087 = vrot.lane.b32.xlu0 %v1040, 32
    %v1088 = vpop.permute.xlu0 %1087
    %v1105 = vsel %vm606, %v1058, 0.0
    %1106 = vadd.xlane.f32.xlu0 %v1105
    %v1107 = vpop.xlane.xlu0 %1106
    %v1108 = vsel %vm606, %v1060, 0.0
    %1109 = vadd.xlane.f32.xlu0 %v1108
    %v1110 = vpop.xlane.xlu0 %1109
    %v1111 = vsel %vm606, %v1062, 0.0
    %1112 = vadd.xlane.f32.xlu0 %v1111
    %v1113 = vpop.xlane.xlu0 %1112
    %v1114 = vsel %vm606, %v1064, 0.0
    %1115 = vadd.xlane.f32.xlu0 %v1114
    %v1116 = vpop.xlane.xlu0 %1115
    %v1117 = vsel %vm606, %v1066, 0.0
    %1118 = vadd.xlane.f32.xlu0 %v1117
    %v1119 = vpop.xlane.xlu0 %1118
    %v1120 = vsel %vm606, %v1068, 0.0
    %1121 = vadd.xlane.f32.xlu0 %v1120
    %v1122 = vpop.xlane.xlu0 %1121
    %v1123 = vsel %vm606, %v1070, 0.0
    %1124 = vadd.xlane.f32.xlu0 %v1123
    %v1125 = vpop.xlane.xlu0 %1124
    %v1126 = vsel %vm606, %v1072, 0.0
    %1127 = vadd.xlane.f32.xlu0 %v1126
    %v1128 = vpop.xlane.xlu0 %1127
    %v1129 = vsel %vm606, %v1074, 0.0
    %1130 = vadd.xlane.f32.xlu0 %v1129
    %v1131 = vpop.xlane.xlu0 %1130
    %v1132 = vsel %vm606, %v1076, 0.0
    %1133 = vadd.xlane.f32.xlu0 %v1132
    %v1134 = vpop.xlane.xlu0 %1133
    %v1135 = vsel %vm606, %v1078, 0.0
    %1136 = vadd.xlane.f32.xlu0 %v1135
    %v1137 = vpop.xlane.xlu0 %1136
    %v1138 = vsel %vm606, %v1080, 0.0
    %1139 = vadd.xlane.f32.xlu0 %v1138
    %v1140 = vpop.xlane.xlu0 %1139
    %v1141 = vsel %vm606, %v1082, 0.0
    %1142 = vadd.xlane.f32.xlu0 %v1141
    %v1143 = vpop.xlane.xlu0 %1142
    %v1144 = vsel %vm606, %v1084, 0.0
    %1145 = vadd.xlane.f32.xlu0 %v1144
    %v1146 = vpop.xlane.xlu0 %1145
    %v1147 = vsel %vm606, %v1086, 0.0
    %1148 = vadd.xlane.f32.xlu0 %v1147
    %v1149 = vpop.xlane.xlu0 %1148
    %v1150 = vsel %vm606, %v1088, 0.0
    %1151 = vadd.xlane.f32.xlu0 %v1150
    %v1152 = vpop.xlane.xlu0 %1151
    %v1153 = vld [vmem:[#allocation2] sm:$0x1]
    %v1155 = vlaneseq
    %v1156 = vshrl.u32 %v1155, 7
    %v1157 = vsub.s32 0, %v1156
    %v1158 = vrot.slane %v1153, %v1157
    %v1160 = vadd.f32 %v1107, %v1158
    %v1161 = vadd.f32 %v1110, %v1158
    %v1162 = vadd.f32 %v1113, %v1158
    %v1163 = vadd.f32 %v1116, %v1158
    %v1164 = vadd.f32 %v1119, %v1158
    %v1165 = vadd.f32 %v1122, %v1158
    %v1166 = vadd.f32 %v1125, %v1158
    %v1167 = vadd.f32 %v1128, %v1158
    %v1168 = vadd.f32 %v1131, %v1158
    %v1169 = vadd.f32 %v1134, %v1158
    %v1170 = vadd.f32 %v1137, %v1158
    %v1171 = vadd.f32 %v1140, %v1158
    %v1172 = vadd.f32 %v1143, %v1158
    %v1173 = vadd.f32 %v1146, %v1158
    %v1174 = vadd.f32 %v1149, %v1158
    %v1175 = vadd.f32 %v1152, %v1158
    %v1176 = vmax.f32 %v1160, 0.0
    %v1177 = vmax.f32 %v1161, 0.0
    %v1178 = vmax.f32 %v1162, 0.0
    %v1179 = vmax.f32 %v1163, 0.0
    %v1180 = vmax.f32 %v1164, 0.0
    %v1181 = vmax.f32 %v1165, 0.0
    %v1182 = vmax.f32 %v1166, 0.0
    %v1183 = vmax.f32 %v1167, 0.0
    %v1184 = vmax.f32 %v1168, 0.0
    %v1185 = vmax.f32 %v1169, 0.0
    %v1186 = vmax.f32 %v1170, 0.0
    %v1187 = vmax.f32 %v1171, 0.0
    %v1188 = vmax.f32 %v1172, 0.0
    %v1189 = vmax.f32 %v1173, 0.0
    %v1190 = vmax.f32 %v1174, 0.0
    %v1191 = vmax.f32 %v1175, 0.0
    %1208 = vset.pattern.permute.xlu0 0
    %1209 = vperm.xlu0 %1208, %v1176
    %v1210 = vpop.permute.xlu0 %1209
    %1211 = vset.pattern.permute.xlu0 0
    %1212 = vperm.xlu0 %1211, %v1177
    %v1213 = vpop.permute.xlu0 %1212
    %1214 = vset.pattern.permute.xlu0 0
    %1215 = vperm.xlu0 %1214, %v1178
    %v1216 = vpop.permute.xlu0 %1215
    %1217 = vset.pattern.permute.xlu0 0
    %1218 = vperm.xlu0 %1217, %v1179
    %v1219 = vpop.permute.xlu0 %1218
    %1220 = vset.pattern.permute.xlu0 0
    %1221 = vperm.xlu0 %1220, %v1180
    %v1222 = vpop.permute.xlu0 %1221
    %1223 = vset.pattern.permute.xlu0 0
    %1224 = vperm.xlu0 %1223, %v1181
    %v1225 = vpop.permute.xlu0 %1224
    %1226 = vset.pattern.permute.xlu0 0
    %1227 = vperm.xlu0 %1226, %v1182
    %v1228 = vpop.permute.xlu0 %1227
    %1229 = vset.pattern.permute.xlu0 0
    %1230 = vperm.xlu0 %1229, %v1183
    %v1231 = vpop.permute.xlu0 %1230
    %1232 = vset.pattern.permute.xlu0 0
    %1233 = vperm.xlu0 %1232, %v1184
    %v1234 = vpop.permute.xlu0 %1233
    %1235 = vset.pattern.permute.xlu0 0
    %1236 = vperm.xlu0 %1235, %v1185
    %v1237 = vpop.permute.xlu0 %1236
    %1238 = vset.pattern.permute.xlu0 0
    %1239 = vperm.xlu0 %1238, %v1186
    %v1240 = vpop.permute.xlu0 %1239
    %1241 = vset.pattern.permute.xlu0 0
    %1242 = vperm.xlu0 %1241, %v1187
    %v1243 = vpop.permute.xlu0 %1242
    %1244 = vset.pattern.permute.xlu0 0
    %1245 = vperm.xlu0 %1244, %v1188
    %v1246 = vpop.permute.xlu0 %1245
    %1247 = vset.pattern.permute.xlu0 0
    %1248 = vperm.xlu0 %1247, %v1189
    %v1249 = vpop.permute.xlu0 %1248
    %1250 = vset.pattern.permute.xlu0 0
    %1251 = vperm.xlu0 %1250, %v1190
    %v1252 = vpop.permute.xlu0 %1251
    %1253 = vset.pattern.permute.xlu0 0
    %1254 = vperm.xlu0 %1253, %v1191
    %v1255 = vpop.permute.xlu0 %1254
    %v1256 = vlaneseq
    %v1257 = vand.u32 %v1256, 127
    %v1258 = vlaneseq
    %v1259 = vshrl.u32 %v1258, 7
    %v1260 = vsub.s32 %v1257, %v1259
    %v1261 = vrot.slane %v1210, %v1260
    %v1262 = vadd.s32 %v1257, 4294967288
    %v1263 = vlaneseq
    %v1264 = vshrl.u32 %v1263, 7
    %v1265 = vsub.s32 %v1262, %v1264
    %v1266 = vrot.slane %v1213, %v1265
    %vm1267 = vcmask 130112
    %v1268 = vsel %vm1267, %v1266, %v1261
    %v1269 = vadd.s32 %v1257, 4294967280
    %v1270 = vlaneseq
    %v1271 = vshrl.u32 %v1270, 7
    %v1272 = vsub.s32 %v1269, %v1271
    %v1273 = vrot.slane %v1216, %v1272
    %vm1274 = vcmask 195712
    %v1275 = vsel %vm1274, %v1273, %v1268
    %v1276 = vadd.s32 %v1257, 4294967272
    %v1277 = vlaneseq
    %v1278 = vshrl.u32 %v1277, 7
    %v1279 = vsub.s32 %v1276, %v1278
    %v1280 = vrot.slane %v1219, %v1279
    %vm1281 = vcmask 261312
    %v1282 = vsel %vm1281, %v1280, %v1275
    %v1283 = vadd.s32 %v1257, 4294967264
    %v1284 = vlaneseq
    %v1285 = vshrl.u32 %v1284, 7
    %v1286 = vsub.s32 %v1283, %v1285
    %v1287 = vrot.slane %v1222, %v1286
    %vm1288 = vcmask 326912
    %v1289 = vsel %vm1288, %v1287, %v1282
    %v1290 = vadd.s32 %v1257, 4294967256
    %v1291 = vlaneseq
    %v1292 = vshrl.u32 %v1291, 7
    %v1293 = vsub.s32 %v1290, %v1292
    %v1294 = vrot.slane %v1225, %v1293
    %vm1295 = vcmask 392512
    %v1296 = vsel %vm1295, %v1294, %v1289
    %v1297 = vadd.s32 %v1257, 4294967248
    %v1298 = vlaneseq
    %v1299 = vshrl.u32 %v1298, 7
    %v1300 = vsub.s32 %v1297, %v1299
    %v1301 = vrot.slane %v1228, %v1300
    %vm1302 = vcmask 458112
    %v1303 = vsel %vm1302, %v1301, %v1296
    %v1304 = vadd.s32 %v1257, 4294967240
    %v1305 = vlaneseq
    %v1306 = vshrl.u32 %v1305, 7
    %v1307 = vsub.s32 %v1304, %v1306
    %v1308 = vrot.slane %v1231, %v1307
    %vm1309 = vcmask 523712
    %v1310 = vsel %vm1309, %v1308, %v1303
    %v1311 = vadd.s32 %v1257, 4294967232
    %v1312 = vlaneseq
    %v1313 = vshrl.u32 %v1312, 7
    %v1314 = vsub.s32 %v1311, %v1313
    %v1315 = vrot.slane %v1234, %v1314
    %vm1316 = vcmask 589312
    %v1317 = vsel %vm1316, %v1315, %v1310
    %v1318 = vadd.s32 %v1257, 4294967224
    %v1319 = vlaneseq
    %v1320 = vshrl.u32 %v1319, 7
    %v1321 = vsub.s32 %v1318, %v1320
    %v1322 = vrot.slane %v1237, %v1321
    %vm1323 = vcmask 654912
    %v1324 = vsel %vm1323, %v1322, %v1317
    %v1325 = vadd.s32 %v1257, 4294967216
    %v1326 = vlaneseq
    %v1327 = vshrl.u32 %v1326, 7
    %v1328 = vsub.s32 %v1325, %v1327
    %v1329 = vrot.slane %v1240, %v1328
    %vm1330 = vcmask 720512
    %v1331 = vsel %vm1330, %v1329, %v1324
    %v1332 = vadd.s32 %v1257, 4294967208
    %v1333 = vlaneseq
    %v1334 = vshrl.u32 %v1333, 7
    %v1335 = vsub.s32 %v1332, %v1334
    %v1336 = vrot.slane %v1243, %v1335
    %vm1337 = vcmask 786112
    %v1338 = vsel %vm1337, %v1336, %v1331
    %v1339 = vadd.s32 %v1257, 4294967200
    %v1340 = vlaneseq
    %v1341 = vshrl.u32 %v1340, 7
    %v1342 = vsub.s32 %v1339, %v1341
    %v1343 = vrot.slane %v1246, %v1342
    %vm1344 = vcmask 851712
    %v1345 = vsel %vm1344, %v1343, %v1338
    %v1346 = vadd.s32 %v1257, 4294967192
    %v1347 = vlaneseq
    %v1348 = vshrl.u32 %v1347, 7
    %v1349 = vsub.s32 %v1346, %v1348
    %v1350 = vrot.slane %v1249, %v1349
    %vm1351 = vcmask 917312
    %v1352 = vsel %vm1351, %v1350, %v1345
    %v1353 = vadd.s32 %v1257, 4294967184
    %v1354 = vlaneseq
    %v1355 = vshrl.u32 %v1354, 7
    %v1356 = vsub.s32 %v1353, %v1355
    %v1357 = vrot.slane %v1252, %v1356
    %vm1358 = vcmask 982912
    %v1359 = vsel %vm1358, %v1357, %v1352
    %v1360 = vadd.s32 %v1257, 4294967176
    %v1361 = vlaneseq
    %v1362 = vshrl.u32 %v1361, 7
    %v1363 = vsub.s32 %v1360, %v1362
    %v1364 = vrot.slane %v1255, %v1363
    %vm1365 = vcmask 1048512
    %v1366 = vsel %vm1365, %v1364, %v1359
    %1368 = vst [vmem:[#allocation9] sm:$0x1] %v1366
    // Predicated region
    $region42: #{tpu_custom_call.1} parent=1 // pred_check
      _
    $region43: #{tpu_custom_call.1} parent=1 // pred_check_branch
      %1370 = sbr.rel (0) target = $region45
    $region44: #{tpu_custom_call.1} parent=1 // pred_region
      %s1372 = ssub.s32 16, 16
      %1373 = vsyncadd [#allocation5], %s1372
      %s1375 = sshll.u32 [#allocation9], 4
      %s1376 = int_to_ptr.vmem [resolvable:$true] %s1375
      %1378 = dma.vmem_to_hbm [thread:$0]  %s1376, 16, %s7, [#allocation5]
    $region45: #{tpu_custom_call.1} parent=1 // pred_fallthru
      _
    // Predicated region
    $region46: #{tpu_custom_call.1} parent=1 // pred_check
      _
    $region47: #{tpu_custom_call.1} parent=1 // pred_check_branch
      %1380 = sbr.rel (0) target = $region49
    $region48: #{tpu_custom_call.1} parent=1 // pred_region
      %1381 = dma.done [#allocation5], 16
    $region49: #{tpu_custom_call.1} parent=1 // pred_fallthru
      _
    %1382 = vsyncpa [#allocation4], 1
    %1383 = vsyncpa [#allocation7], 1
    %1384 = vsyncpa [#allocation5], 1

</llo_original>
